<compile_context>
chip_gen: v7x
topology: tpu7x:2x2x1
jax: 0.10.0
libtpu: 0.0.40
codegen_flags: <defaults>
</compile_context>

<pallas_src>
import functools

import jax
import jax.numpy as jnp
from jax.experimental import pallas as pl
from jax.experimental.pallas import tpu as pltpu


# ----------------------------------------------------------------------------
# Kernels
# ----------------------------------------------------------------------------

def grn_fused_kernel(x_ref, gamma_ref, beta_ref, o_ref, *, chunk):
    """Single-pass GRN on one or more full (HW, C) feature maps.

    The reduction and the epilogue both stream the block in `chunk`-row
    slices, so no full-block f32 temporary is ever materialized.
    """
    nb, hw, c = x_ref.shape
    nchunks = hw // chunk                                    # chunk divides hw

    gamma = gamma_ref[...].astype(jnp.float32)[None]         # (1, 1, C)
    beta = beta_ref[...].astype(jnp.float32)[None]           # (1, 1, C)

    # Pass A: per-(batch, channel) sum of squares over the spatial rows.
    def ssq_body(i, acc):
        s = pl.multiple_of(i * chunk, chunk)
        xf = x_ref[:, pl.ds(s, chunk), :].astype(jnp.float32)
        return acc + jnp.sum(xf * xf, axis=1, keepdims=True)

    ssq = jax.lax.fori_loop(0, nchunks, ssq_body,
                            jnp.zeros((nb, 1, c), jnp.float32))

    gx = jnp.sqrt(ssq)                                        # (nb, 1, C)
    mean = jnp.mean(gx, axis=-1, keepdims=True)               # (nb, 1, 1)
    nx = gx / (mean + 1e-6)
    # Folded epilogue: gamma*(x*nx) + beta + x == x*(1 + gamma*nx) + beta.
    scale = 1.0 + gamma * nx                                  # (nb, 1, C) f32

    # Pass B: out = x * scale + beta, streamed in the same chunks (f32 math,
    # cast only at the store).
    @pl.loop(0, nchunks)
    def _(i):
        s = pl.multiple_of(i * chunk, chunk)
        xf = x_ref[:, pl.ds(s, chunk), :].astype(jnp.float32)
        o_ref[:, pl.ds(s, chunk), :] = (xf * scale + beta).astype(o_ref.dtype)


def grn_ssq_kernel(x_ref, ssq_ref):
    """Two-pass, pass 1: accumulate per-(batch, channel) sum-of-squares."""
    @pl.when(pl.program_id(1) == 0)
    def _():
        ssq_ref[...] = jnp.zeros_like(ssq_ref)
    xf = x_ref[...].astype(jnp.float32)                       # (1, tHW, C)
    ssq_ref[...] += jnp.sum(xf * xf, axis=1, keepdims=True)   # (1, 1, C) f32


def grn_apply_kernel(x_ref, scale_ref, beta_ref, o_ref):
    """Two-pass, pass 2: streamed out = x * scale + beta (f32 math)."""
    xf = x_ref[...].astype(jnp.float32)                       # (1, tHW, C)
    scale = scale_ref[...]                                    # (1, 1, C) f32
    beta = beta_ref[...].astype(jnp.float32)[None]            # (1, 1, C)
    o_ref[...] = (xf * scale + beta).astype(o_ref.dtype)


# ----------------------------------------------------------------------------
# Wrapper helpers
# ----------------------------------------------------------------------------

def _default_vmem_budget():
    """Physical-VMEM-aware budget for vmem_limit_bytes."""
    cap = None
    try:
        cap = getattr(pltpu.get_tpu_info(), "vmem_capacity_bytes", None)
    except Exception:
        cap = None
    if cap is not None and cap >= (96 << 20):
        return 100 << 20      # v5e / v6e: 128 MiB physical VMEM
    return 44 << 20           # v7x (64 MiB physical) or unknown: keep headroom


def _sublane_step(itemsize):
    """Packed-sublane native row count: 8 (f32), 16 (bf16), 32 (8-bit)."""
    return max(8, 32 // max(itemsize, 1))


def _choose_batch_block(n, elem_bytes, target_bytes, per_batch_vmem, budget):
    """Pick the batch-block size nb (a divisor of n).

    Preference: >= 4 grid steps (2+ per TensorCore on dual-core chips), an
    even number of steps, then the largest nb fitting `target_bytes`.  nb=1 is
    always allowed even above target (a single feature map can't be split
    here); the hard VMEM budget is always respected.
    """
    best, best_key = 1, None
    for nb in range(1, n + 1):
        if n % nb:
            continue
        if nb * per_batch_vmem > budget:
            continue
        if nb > 1 and nb * elem_bytes > target_bytes:
            continue
        steps = n // nb
        key = (min(steps, 4), 1 if steps % 2 == 0 else 0, nb)
        if best_key is None or key > best_key:
            best, best_key = nb, key
    return best


def _choose_hw_tile(hw, row_bytes, target_bytes, step):
    """Largest multiple-of-`step` divisor of hw whose tile fits target_bytes."""
    limit = max(step, target_bytes // max(row_bytes, 1))
    best = None
    for d in range(step, hw + 1, step):
        if hw % d == 0 and d <= limit:
            best = d
    if best is None:
        for d in range(step, hw + 1, step):
            if hw % d == 0:
                best = d
                break
    return best if best is not None else hw


def _choose_chunk(hw, step, max_chunk=256):
    """Multiple-of-`step` divisor of hw, as large as possible but <= max_chunk."""
    best = None
    for d in range(step, min(hw, max_chunk) + 1, step):
        if hw % d == 0:
            best = d
    return best if best is not None else hw


# ----------------------------------------------------------------------------
# Public entry point
# ----------------------------------------------------------------------------

def grn(x, gamma, beta, *, target_block_bytes=6 << 20,
        vmem_budget_bytes=None, force_two_pass=False):
    """GRN forward. x: (N, H, W, C) NHWC; gamma, beta: (1, 1, 1, C)."""
    N, H, W, C = x.shape
    HW = H * W
    itemsize = jnp.dtype(x.dtype).itemsize
    step = _sublane_step(itemsize)
    margin = 4 << 20  # Mosaic internal scratch / small operands headroom.

    if vmem_budget_bytes is None:
        vmem_budget_bytes = _default_vmem_budget()

    x_flat = x.reshape(N, HW, C)
    g2 = gamma.reshape(1, C)
    b2 = beta.reshape(1, C)

    elem_bytes = HW * C * itemsize                 # one feature map, native dtype
    chunk = _choose_chunk(HW, step)                # rows per in-kernel slice
    chunk_f32 = chunk * C * 4
    # 2 in + 2 out pipelined copies of the block plus two chunk-sized f32 temps.
    per_batch_vmem = 4 * elem_bytes + 2 * chunk_f32

    use_single_pass = (per_batch_vmem + margin <= vmem_budget_bytes
                       and not force_two_pass)

    if use_single_pass:
        nb = _choose_batch_block(N, elem_bytes, target_block_bytes,
                                 per_batch_vmem, vmem_budget_bytes - margin)
        vlim = int(min(max(nb * per_batch_vmem + margin, 16 << 20),
                       vmem_budget_bytes))
        out_flat = pl.pallas_call(
            functools.partial(grn_fused_kernel, chunk=chunk),
            out_shape=jax.ShapeDtypeStruct((N, HW, C), x.dtype),
            grid_spec=pltpu.PrefetchScalarGridSpec(
                num_scalar_prefetch=0,
                grid=(N // nb,),
                in_specs=[
                    pl.BlockSpec((nb, HW, C), lambda b: (b, 0, 0)),
                    pl.BlockSpec((1, C), lambda b: (0, 0)),
                    pl.BlockSpec((1, C), lambda b: (0, 0)),
                ],
                out_specs=pl.BlockSpec((nb, HW, C), lambda b: (b, 0, 0)),
            ),
            compiler_params=pltpu.CompilerParams(
                dimension_semantics=("parallel",),
                vmem_limit_bytes=vlim),
        )(x_flat, g2, b2)
    else:
        # ---- Two-pass fallback for feature maps too large for single-pass ----
        # TODO(synk): a single phase-grid pallas_call (grid=(N, 2, HW//tHW) with
        # a VMEM ssq accumulator) would drop the extra launch and ssq/scale HBM
        # round-trip for small N; kept as two calls here for simplicity.
        tile_target = min(target_block_bytes,
                          max(1 << 20, (vmem_budget_bytes - margin) // 12))
        tHW = _choose_hw_tile(HW, C * itemsize, tile_target, step)
        tile_bytes = tHW * C * itemsize
        tile_f32 = tHW * C * 4
        # 3 in (Buffered) + 2 out buffers + ~2 f32-sized temps + margin.
        vlim = int(min(max(5 * tile_bytes + 2 * tile_f32 + margin, 16 << 20),
                       vmem_budget_bytes))

        # Pass 1: per-(batch, channel) sum-of-squares over HW tiles.
        ssq = pl.pallas_call(
            grn_ssq_kernel,
            out_shape=jax.ShapeDtypeStruct((N, 1, C), jnp.float32),
            grid_spec=pltpu.PrefetchScalarGridSpec(
                num_scalar_prefetch=0,
                grid=(N, HW // tHW),
                in_specs=[pl.BlockSpec((1, tHW, C), lambda b, k: (b, k, 0),
                                       pipeline_mode=pl.Buffered(3))],
                out_specs=pl.BlockSpec((1, 1, C), lambda b, k: (b, 0, 0)),
            ),
            compiler_params=pltpu.CompilerParams(
                dimension_semantics=("parallel", "arbitrary"),
                vmem_limit_bytes=vlim),
        )(x_flat)

        # Tiny per-(batch, channel) finish in plain JAX, kept in f32.
        gx = jnp.sqrt(ssq)                                    # (N, 1, C)
        mean = jnp.mean(gx, axis=-1, keepdims=True)
        nx = gx / (mean + 1e-6)
        scale = 1.0 + g2[None].astype(jnp.float32) * nx       # (N, 1, C) f32

        # Pass 2: stream HW tiles applying the folded epilogue.
        out_flat = pl.pallas_call(
            grn_apply_kernel,
            out_shape=jax.ShapeDtypeStruct((N, HW, C), x.dtype),
            grid_spec=pltpu.PrefetchScalarGridSpec(
                num_scalar_prefetch=0,
                grid=(N, HW // tHW),
                in_specs=[
                    pl.BlockSpec((1, tHW, C), lambda b, k: (b, k, 0),
                                 pipeline_mode=pl.Buffered(3)),
                    pl.BlockSpec((1, 1, C), lambda b, k: (b, 0, 0)),
                    pl.BlockSpec((1, C), lambda b, k: (0, 0)),
                ],
                out_specs=pl.BlockSpec((1, tHW, C), lambda b, k: (b, k, 0)),
            ),
            compiler_params=pltpu.CompilerParams(
                dimension_semantics=("parallel", "parallel"),
                vmem_limit_bytes=vlim),
        )(x_flat, scale, b2)

    return out_flat.reshape(N, H, W, C)


def grn_reference(x, gamma, beta):
    """Pure-JAX mirror of the PyTorch forward (for verification)."""
    gx = jnp.sqrt(jnp.sum(x.astype(jnp.float32) ** 2, axis=(1, 2), keepdims=True))
    nx = gx / (jnp.mean(gx, axis=-1, keepdims=True) + 1e-6)
    return (gamma * (x * nx) + beta + x).astype(x.dtype)


if __name__ == "__main__":
    # Small NHWC shapes: batch=2, spatial=16x16, channels=32
    N, H, W, C = 2, 16, 16, 32
    key = jax.random.PRNGKey(0)
    kx, kg, kb = jax.random.split(key, 3)

    x = jax.random.normal(kx, (N, H, W, C), dtype=jnp.float32)
    # The module's __init__ zero-inits gamma/beta (which would make GRN an
    # identity); use deterministic nonzero values to exercise the kernel.
    gamma = 0.1 * jax.random.normal(kg, (1, 1, 1, C), dtype=jnp.float32)
    beta = 0.1 * jax.random.normal(kb, (1, 1, 1, C), dtype=jnp.float32)

    ref = grn_reference(x, gamma, beta)

    # Single-pass (fused) path.
    out = jax.block_until_ready(grn(x, gamma, beta))
    assert out.shape == (N, H, W, C)
    assert jnp.allclose(out, ref, atol=1e-5, rtol=1e-5), "fused path mismatch"

    # Two-pass fallback path (forced, to validate the large-feature-map route).
    out2 = jax.block_until_ready(grn(x, gamma, beta, force_two_pass=True))
    assert out2.shape == (N, H, W, C)
    assert jnp.allclose(out2, ref, atol=1e-5, rtol=1e-5), "two-pass path mismatch"

    print("KERNEL_OK")
</pallas_src>

<mosaic_0001>
module attributes {stable_mosaic.version = 11 : i64} {
  func.func @grn_fused_kernel(%arg0: i32, %arg1: memref<1x256x32xf32, #tpu.memory_space<vmem>>, %arg2: memref<1x32xf32, #tpu.memory_space<vmem>>, %arg3: memref<1x32xf32, #tpu.memory_space<vmem>>, %arg4: memref<1x256x32xf32, #tpu.memory_space<vmem>>) attributes {dimension_semantics = [#tpu.dimension_semantics<parallel>], iteration_bounds = array<i64: 2>, scalar_prefetch = 0 : i64, scratch_operands = 0 : i64, tpu.core_type = #tpu.core_type<tc>, window_params = [{transform_indices = @transform_0, window_bounds = array<i64: 1, 256, 32>}, {pipeline_mode = #tpu.pipeline_mode<synchronous>, transform_indices = @transform_1, window_bounds = array<i64: 1, 32>}, {pipeline_mode = #tpu.pipeline_mode<synchronous>, transform_indices = @transform_2, window_bounds = array<i64: 1, 32>}, {transform_indices = @transform_3, window_bounds = array<i64: 1, 256, 32>}]} {
    %c0 = arith.constant 0 : index
    %c0_0 = arith.constant 0 : index
    %0 = vector.load %arg2[%c0, %c0_0] : memref<1x32xf32, #tpu.memory_space<vmem>>, vector<1x32xf32>
    %1 = vector.shape_cast %0 : vector<1x32xf32> to vector<1x1x32xf32>
    %c0_1 = arith.constant 0 : index
    %c0_2 = arith.constant 0 : index
    %2 = vector.load %arg3[%c0_1, %c0_2] : memref<1x32xf32, #tpu.memory_space<vmem>>, vector<1x32xf32>
    %3 = vector.shape_cast %2 : vector<1x32xf32> to vector<1x1x32xf32>
    %cst = arith.constant 0.000000e+00 : f32
    %4 = vector.broadcast %cst : f32 to vector<1x1x32xf32>
    %c0_i32 = arith.constant 0 : i32
    %c256_i32 = arith.constant 256 : i32
    %5 = arith.muli %c0_i32, %c256_i32 : i32
    %6 = tpu.assume_multiple %5, 256 : i32
    %c0_3 = arith.constant 0 : index
    %7 = arith.index_cast %6 : i32 to index
    %c0_4 = arith.constant 0 : index
    %8 = vector.load %arg1[%c0_3, %7, %c0_4] : memref<1x256x32xf32, #tpu.memory_space<vmem>>, vector<1x256x32xf32>
    %9 = arith.mulf %8, %8 : vector<1x256x32xf32>
    %cst_5 = arith.constant dense<0.000000e+00> : vector<1x32xf32>
    %10 = vector.multi_reduction <add>, %9, %cst_5 [1] : vector<1x256x32xf32> to vector<1x32xf32>
    %11 = vector.shape_cast %10 : vector<1x32xf32> to vector<1x1x32xf32>
    %12 = arith.addf %4, %11 : vector<1x1x32xf32>
    %c1_i32 = arith.constant 1 : i32
    %13 = math.sqrt %12 : vector<1x1x32xf32>
    %cst_6 = arith.constant dense<0.000000e+00> : vector<1x1xf32>
    %14 = vector.multi_reduction <add>, %13, %cst_6 [2] : vector<1x1x32xf32> to vector<1x1xf32>
    %15 = vector.shape_cast %14 : vector<1x1xf32> to vector<1x1x1xf32>
    %cst_7 = arith.constant 3.200000e+01 : f32
    %16 = vector.broadcast %cst_7 : f32 to vector<1x1x1xf32>
    %17 = arith.divf %15, %16 : vector<1x1x1xf32>
    %cst_8 = arith.constant 9.99999997E-7 : f32
    %18 = vector.broadcast %cst_8 : f32 to vector<1x1x1xf32>
    %19 = arith.addf %17, %18 : vector<1x1x1xf32>
    %20 = vector.broadcast %19 : vector<1x1x1xf32> to vector<1x1x32xf32>
    %21 = arith.divf %13, %20 : vector<1x1x32xf32>
    %22 = arith.mulf %1, %21 : vector<1x1x32xf32>
    %cst_9 = arith.constant 1.000000e+00 : f32
    %23 = vector.broadcast %cst_9 : f32 to vector<1x1x32xf32>
    %24 = arith.addf %23, %22 : vector<1x1x32xf32>
    %c0_i32_10 = arith.constant 0 : i32
    %c1_i32_11 = arith.constant 1 : i32
    %25 = arith.muli %c0_i32_10, %c1_i32_11 : i32
    %c0_i32_12 = arith.constant 0 : i32
    %26 = arith.addi %c0_i32_12, %25 : i32
    %c256_i32_13 = arith.constant 256 : i32
    %27 = arith.muli %26, %c256_i32_13 : i32
    %28 = tpu.assume_multiple %27, 256 : i32
    %c0_14 = arith.constant 0 : index
    %29 = arith.index_cast %28 : i32 to index
    %c0_15 = arith.constant 0 : index
    %30 = vector.load %arg1[%c0_14, %29, %c0_15] : memref<1x256x32xf32, #tpu.memory_space<vmem>>, vector<1x256x32xf32>
    %31 = vector.broadcast %24 : vector<1x1x32xf32> to vector<1x256x32xf32>
    %32 = arith.mulf %30, %31 : vector<1x256x32xf32>
    %33 = vector.broadcast %3 : vector<1x1x32xf32> to vector<1x256x32xf32>
    %34 = arith.addf %32, %33 : vector<1x256x32xf32>
    %c0_16 = arith.constant 0 : index
    %35 = arith.index_cast %28 : i32 to index
    %c0_17 = arith.constant 0 : index
    %36 = vector.load %arg4[%c0_16, %35, %c0_17] : memref<1x256x32xf32, #tpu.memory_space<vmem>>, vector<1x256x32xf32>
    tpu.vector_store %arg4[%c0_16, %35, %c0_17], %34 {strides = array<i32>} : memref<1x256x32xf32, #tpu.memory_space<vmem>>, vector<1x256x32xf32>,
    %c1_i32_18 = arith.constant 1 : i32
    return
  }
  func.func @transform_0(%arg0: i32) -> (i32, i32, i32) {
    %c0_i32 = arith.constant 0 : i32
    %c0_i32_0 = arith.constant 0 : i32
    %c0_i32_1 = arith.constant 0 : i32
    return %arg0, %c0_i32, %c0_i32_0 : i32, i32, i32
  }
  func.func @transform_1(%arg0: i32) -> (i32, i32) {
    %c0_i32 = arith.constant 0 : i32
    %c0_i32_0 = arith.constant 0 : i32
    %c0_i32_1 = arith.constant 0 : i32
    return %c0_i32, %c0_i32_0 : i32, i32
  }
  func.func @transform_2(%arg0: i32) -> (i32, i32) {
    %c0_i32 = arith.constant 0 : i32
    %c0_i32_0 = arith.constant 0 : i32
    %c0_i32_1 = arith.constant 0 : i32
    return %c0_i32, %c0_i32_0 : i32, i32
  }
  func.func @transform_3(%arg0: i32) -> (i32, i32, i32) {
    %c0_i32 = arith.constant 0 : i32
    %c0_i32_0 = arith.constant 0 : i32
    %c0_i32_1 = arith.constant 0 : i32
    return %arg0, %c0_i32, %c0_i32_0 : i32, i32, i32
  }
}

</mosaic_0001>

<llo_original>
// kernel: tpu_custom_call.1
$region0: #{tpu_custom_call.1}
  #allocation0 [shape = 'u32[]', space=smem, size = 0x4, offset = 0x4, fixed_abs, tag = 'smem constant byte address 0x4 - core index']
  #allocation1 [shape = 'u32[144,128]{1,0:T(1,128)}', space=vmem, size = 0x12000, scoped, tag = 'internal scratch']
  %s0 = inlined_call_operand.vmem [shape: f32[2,256,32], index: 0, kind: input, shape index: {}]
  %s1 = inlined_call_operand.vmem [shape: f32[1,32], index: 1, kind: input, shape index: {}]
  %s2 = inlined_call_operand.vmem [shape: f32[1,32], index: 2, kind: input, shape index: {}]
  %s3 = inlined_call_operand.vmem [shape: f32[2,256,32], index: 3, kind: output, shape index: {}]
  %s4 = sld [smem:[#allocation0]]
  $region45: #{tpu_custom_call.1} parent=0
    _
  %s6 = ssub.s32 1, %s4
  %s7 = scalar_select 0, %s6, %s4
  loop: start=0, step=1, limit=4
  $region2: #{tpu_custom_call.1} parent=0 // loop_pre_header
    _
  $region3: #{tpu_custom_call.1} parent=0 // loop_header
    %s9 = sphi 0, %s13
    %p10 = scmp.ge.s32.totalorder %s9, 4
    %s19 = sphi 0, %s21
    %s22 = sphi 0, %s19
    %s23 = sphi 0, %s22
    %s39 = sphi 0, %s23
    %s43 = sphi 0, %s43
    %s45 = sphi 0, %s43
    %s46 = sphi 0, %s45
    %s60 = sphi 0, %s46
    %s64 = sphi 0, %s64
    %s66 = sphi 0, %s64
    %s67 = sphi 0, %s66
    %s81 = sphi 0, %s67
    %s87 = sphi 0, %s89
    %s90 = sphi 0, %s87
    %s91 = sphi 0, %s90
    %s107 = sphi 0, %s91
  $region4: #{tpu_custom_call.1} parent=0 // loop_header_branch
    %12 = sbr.rel (%p10) target = $region8
  $region5: #{tpu_custom_call.1} parent=0 // loop_body
    %s14 = ssub.s32 %s9, 1
    %s15 = ssub.s32 %s9, 2
    %s16 = sadd.s32 %s9, 1
    %s17 = ssub.s32 %s9, %s16
    %p18 = scmp.eq.s32.totalorder %s17, 0
    %s20 = sadd.s32 %s19, 1
    %s21 = scalar_select %p18, %s19, %s20
    %p24 = pneg %p18
    %p25 = scmp.eq.s32.totalorder %s9, 1
    %p26 = por %p24, %p25
    %p27 = scmp.ne.s32.totalorder %s19, %s22
    %p28 = scmp.eq.s32.totalorder %s9, 0
    %p29 = por %p27, %p28
    %p30 = scmp.ne.s32.totalorder %s19, %s22
    %p31 = scmp.eq.s32.totalorder %s14, 1
    %p32 = por %p30, %p31
    %p33 = scmp.ne.s32.totalorder %s22, %s23
    %p34 = scmp.eq.s32.totalorder %s14, 0
    %p35 = por %p33, %p34
    %p36 = scmp.ne.s32.totalorder %s22, %s23
    %p37 = scmp.eq.s32.totalorder %s15, 1
    %p38 = por %p36, %p37
    %p40 = scmp.ne.s32.totalorder %s23, %s39
    %p41 = scmp.eq.s32.totalorder %s15, 0
    %p42 = por %p40, %p41
    %s44 = sadd.s32 %s43, 1
    %p47 = scmp.eq.s32.totalorder %s9, 1
    %p48 = scmp.ne.s32.totalorder %s43, %s45
    %p49 = scmp.eq.s32.totalorder %s9, 0
    %p50 = por %p48, %p49
    %p51 = scmp.ne.s32.totalorder %s43, %s45
    %p52 = scmp.eq.s32.totalorder %s14, 1
    %p53 = por %p51, %p52
    %p54 = scmp.ne.s32.totalorder %s45, %s46
    %p55 = scmp.eq.s32.totalorder %s14, 0
    %p56 = por %p54, %p55
    %p57 = scmp.ne.s32.totalorder %s45, %s46
    %p58 = scmp.eq.s32.totalorder %s15, 1
    %p59 = por %p57, %p58
    %p61 = scmp.ne.s32.totalorder %s46, %s60
    %p62 = scmp.eq.s32.totalorder %s15, 0
    %p63 = por %p61, %p62
    %s65 = sadd.s32 %s64, 1
    %p68 = scmp.eq.s32.totalorder %s9, 1
    %p69 = scmp.ne.s32.totalorder %s64, %s66
    %p70 = scmp.eq.s32.totalorder %s9, 0
    %p71 = por %p69, %p70
    %p72 = scmp.ne.s32.totalorder %s64, %s66
    %p73 = scmp.eq.s32.totalorder %s14, 1
    %p74 = por %p72, %p73
    %p75 = scmp.ne.s32.totalorder %s66, %s67
    %p76 = scmp.eq.s32.totalorder %s14, 0
    %p77 = por %p75, %p76
    %p78 = scmp.ne.s32.totalorder %s66, %s67
    %p79 = scmp.eq.s32.totalorder %s15, 1
    %p80 = por %p78, %p79
    %p82 = scmp.ne.s32.totalorder %s67, %s81
    %p83 = scmp.eq.s32.totalorder %s15, 0
    %p84 = por %p82, %p83
    %s85 = ssub.s32 %s9, %s16
    %p86 = scmp.eq.s32.totalorder %s85, 0
    %s88 = sadd.s32 %s87, 1
    %s89 = scalar_select %p86, %s87, %s88
    %p92 = pneg %p86
    %p93 = scmp.eq.s32.totalorder %s9, 1
    %p94 = por %p92, %p93
    %p95 = scmp.ne.s32.totalorder %s87, %s90
    %p96 = scmp.eq.s32.totalorder %s9, 0
    %p97 = por %p95, %p96
    %p98 = scmp.ne.s32.totalorder %s87, %s90
    %p99 = scmp.eq.s32.totalorder %s14, 1
    %p100 = por %p98, %p99
    %p101 = scmp.ne.s32.totalorder %s90, %s91
    %p102 = scmp.eq.s32.totalorder %s14, 0
    %p103 = por %p101, %p102
    %p104 = scmp.ne.s32.totalorder %s90, %s91
    %p105 = scmp.eq.s32.totalorder %s15, 1
    %p106 = por %p104, %p105
    %p108 = scmp.ne.s32.totalorder %s91, %s107
    %p109 = scmp.eq.s32.totalorder %s15, 0
    %p110 = por %p108, %p109
    %p111 = scmp.le.s32.totalorder 1, %s9
    %p112 = scmp.lt.s32.totalorder %s9, 3
    %p113 = pnand %p111, %p112
    %p114 = pneg %p113
    // Predicated region
    $region9: #{tpu_custom_call.1} parent=5 // pred_check
      _
    $region10: #{tpu_custom_call.1} parent=5 // pred_check_branch
      %116 = sbr.rel (%p113) target = $region12
    $region11: #{tpu_custom_call.1} parent=5 // pred_region
      %s117 = ssub.s32 %s9, 1
      // Predicated region
      $region13: #{tpu_custom_call.1} parent=11 // pred_check
        %p118 = pneg %p56
      $region14: #{tpu_custom_call.1} parent=11 // pred_check_branch
        %120 = sbr.rel (%p118) target = $region16
      $region15: #{tpu_custom_call.1} parent=11 // pred_region
        _
      $region16: #{tpu_custom_call.1} parent=11 // pred_fallthru
        _
      // Predicated region
      $region17: #{tpu_custom_call.1} parent=11 // pred_check
        %p121 = pneg %p77
      $region18: #{tpu_custom_call.1} parent=11 // pred_check_branch
        %123 = sbr.rel (%p121) target = $region20
      $region19: #{tpu_custom_call.1} parent=11 // pred_region
        _
      $region20: #{tpu_custom_call.1} parent=11 // pred_fallthru
        _
    $region12: #{tpu_custom_call.1} parent=5 // pred_fallthru
      _
    %p124 = scmp.lt.s32.totalorder %s9, 2
    // Predicated region
    $region21: #{tpu_custom_call.1} parent=5 // pred_check
      %p125 = pneg %p124
    $region22: #{tpu_custom_call.1} parent=5 // pred_check_branch
      %127 = sbr.rel (%p125) target = $region24
    $region23: #{tpu_custom_call.1} parent=5 // pred_region
      // Predicated region
      $region25: #{tpu_custom_call.1} parent=23 // pred_check
        %p128 = pneg %p29
      $region26: #{tpu_custom_call.1} parent=23 // pred_check_branch
        %130 = sbr.rel (%p128) target = $region28
      $region27: #{tpu_custom_call.1} parent=23 // pred_region
        %p131 = scmp.lt.s32.totalorder %s9, 1
        %s132 = scalar_select %p131, %s9, 1
        %s133 = smul.addr %s132, 32
        %s134 = smul.addr %s133, 8
        %s135 = scalar_lea.vmem %s0, %s134
      $region28: #{tpu_custom_call.1} parent=23 // pred_fallthru
        _
    $region24: #{tpu_custom_call.1} parent=5 // pred_fallthru
      _
    %p136 = scmp.le.s32.totalorder 1, %s9
    %p137 = scmp.lt.s32.totalorder %s9, 3
    %p138 = pnand %p136, %p137
    %p139 = pneg %p138
    // Predicated region
    $region29: #{tpu_custom_call.1} parent=5 // pred_check
      _
    $region30: #{tpu_custom_call.1} parent=5 // pred_check_branch
      %141 = sbr.rel (%p138) target = $region32
    $region31: #{tpu_custom_call.1} parent=5 // pred_region
      %s142 = ssub.s32 %s9, 1
      %p143 = scmp.lt.s32.totalorder %s14, 1
      %s144 = scalar_select %p143, %s14, 1
      %s145 = smul.addr %s144, 32
      %s146 = smul.addr %s145, 8
      %s147 = scalar_lea.vmem %s0, %s146
      %p148 = pneg %p35
      %p149 = pneg %p32
      %p150 = pneg %p56
      %p151 = pneg %p53
      %p152 = pneg %p77
      %p153 = pneg %p74
      %p154 = pneg %p103
      %p155 = pneg %p100
      %p156 = scmp.lt.s32.totalorder %s14, 1
      %s157 = scalar_select %p156, %s14, 1
      %s158 = smul.addr %s157, 32
      %s159 = smul.addr %s158, 8
      %s160 = scalar_lea.vmem %s3, %s159
      %p161 = scmp.lt.s32.totalorder %s14, 1
      %s162 = scalar_select %p161, %s14, 1
      %s163 = smul.addr %s162, 32
      %s164 = smul.addr %s163, 8
      %s165 = scalar_lea.vmem %s0, %s164
      %p166 = scmp.lt.s32.totalorder %s14, 1
      %s167 = scalar_select %p166, %s14, 1
      %s168 = smul.addr %s167, 32
      %s169 = smul.addr %s168, 8
      %s170 = scalar_lea.vmem %s3, %s169
      %v171 = vld [vmem:[%s1] sm:$0x1]
      %v172 = vld [vmem:[%s2] sm:$0x1]
      %v173 = vld [vmem:[%s165] sm:$0xff]
      %v174 = vld [vmem:[%s165 + $0x8] sm:$0xff]
      %v175 = vld [vmem:[%s165 + $0x10] sm:$0xff]
      %v176 = vld [vmem:[%s165 + $0x18] sm:$0xff]
      %v177 = vld [vmem:[%s165 + $0x20] sm:$0xff]
      %v178 = vld [vmem:[%s165 + $0x28] sm:$0xff]
      %v179 = vld [vmem:[%s165 + $0x30] sm:$0xff]
      %v180 = vld [vmem:[%s165 + $0x38] sm:$0xff]
      %v181 = vld [vmem:[%s165 + $0x40] sm:$0xff]
      %v182 = vld [vmem:[%s165 + $0x48] sm:$0xff]
      %v183 = vld [vmem:[%s165 + $0x50] sm:$0xff]
      %v184 = vld [vmem:[%s165 + $0x58] sm:$0xff]
      %v185 = vld [vmem:[%s165 + $0x60] sm:$0xff]
      %v186 = vld [vmem:[%s165 + $0x68] sm:$0xff]
      %v187 = vld [vmem:[%s165 + $0x70] sm:$0xff]
      %v188 = vld [vmem:[%s165 + $0x78] sm:$0xff]
      %v189 = vld [vmem:[%s165 + $0x80] sm:$0xff]
      %v190 = vld [vmem:[%s165 + $0x88] sm:$0xff]
      %v191 = vld [vmem:[%s165 + $0x90] sm:$0xff]
      %v192 = vld [vmem:[%s165 + $0x98] sm:$0xff]
      %v193 = vld [vmem:[%s165 + $0xa0] sm:$0xff]
      %v194 = vld [vmem:[%s165 + $0xa8] sm:$0xff]
      %v195 = vld [vmem:[%s165 + $0xb0] sm:$0xff]
      %v196 = vld [vmem:[%s165 + $0xb8] sm:$0xff]
      %v197 = vld [vmem:[%s165 + $0xc0] sm:$0xff]
      %v198 = vld [vmem:[%s165 + $0xc8] sm:$0xff]
      %v199 = vld [vmem:[%s165 + $0xd0] sm:$0xff]
      %v200 = vld [vmem:[%s165 + $0xd8] sm:$0xff]
      %v201 = vld [vmem:[%s165 + $0xe0] sm:$0xff]
      %v202 = vld [vmem:[%s165 + $0xe8] sm:$0xff]
      %v203 = vld [vmem:[%s165 + $0xf0] sm:$0xff]
      %v204 = vld [vmem:[%s165 + $0xf8] sm:$0xff]
      %v205 = vmul.f32 %v173, %v173
      %v206 = vmul.f32 %v174, %v174
      %v207 = vmul.f32 %v175, %v175
      %v208 = vmul.f32 %v176, %v176
      %v209 = vmul.f32 %v177, %v177
      %v210 = vmul.f32 %v178, %v178
      %v211 = vmul.f32 %v179, %v179
      %v212 = vmul.f32 %v180, %v180
      %v213 = vmul.f32 %v181, %v181
      %v214 = vmul.f32 %v182, %v182
      %v215 = vmul.f32 %v183, %v183
      %v216 = vmul.f32 %v184, %v184
      %v217 = vmul.f32 %v185, %v185
      %v218 = vmul.f32 %v186, %v186
      %v219 = vmul.f32 %v187, %v187
      %v220 = vmul.f32 %v188, %v188
      %v221 = vmul.f32 %v189, %v189
      %v222 = vmul.f32 %v190, %v190
      %v223 = vmul.f32 %v191, %v191
      %v224 = vmul.f32 %v192, %v192
      %v225 = vmul.f32 %v193, %v193
      %v226 = vmul.f32 %v194, %v194
      %v227 = vmul.f32 %v195, %v195
      %v228 = vmul.f32 %v196, %v196
      %v229 = vmul.f32 %v197, %v197
      %v230 = vmul.f32 %v198, %v198
      %v231 = vmul.f32 %v199, %v199
      %v232 = vmul.f32 %v200, %v200
      %v233 = vmul.f32 %v201, %v201
      %v234 = vmul.f32 %v202, %v202
      %v235 = vmul.f32 %v203, %v203
      %v236 = vmul.f32 %v204, %v204
      %vm237 = vcmask 261120
      %v238 = vsel %vm237, %v205, 0.0
      %v239 = vsel %vm237, %v206, 0.0
      %v240 = vadd.f32 %v238, %v239
      %v241 = vsel %vm237, %v207, 0.0
      %v242 = vadd.f32 %v240, %v241
      %v243 = vsel %vm237, %v208, 0.0
      %v244 = vadd.f32 %v242, %v243
      %v245 = vsel %vm237, %v209, 0.0
      %v246 = vadd.f32 %v244, %v245
      %v247 = vsel %vm237, %v210, 0.0
      %v248 = vadd.f32 %v246, %v247
      %v249 = vsel %vm237, %v211, 0.0
      %v250 = vadd.f32 %v248, %v249
      %v251 = vsel %vm237, %v212, 0.0
      %v252 = vadd.f32 %v250, %v251
      %v253 = vsel %vm237, %v213, 0.0
      %v254 = vadd.f32 %v252, %v253
      %v255 = vsel %vm237, %v214, 0.0
      %v256 = vadd.f32 %v254, %v255
      %v257 = vsel %vm237, %v215, 0.0
      %v258 = vadd.f32 %v256, %v257
      %v259 = vsel %vm237, %v216, 0.0
      %v260 = vadd.f32 %v258, %v259
      %v261 = vsel %vm237, %v217, 0.0
      %v262 = vadd.f32 %v260, %v261
      %v263 = vsel %vm237, %v218, 0.0
      %v264 = vadd.f32 %v262, %v263
      %v265 = vsel %vm237, %v219, 0.0
      %v266 = vadd.f32 %v264, %v265
      %v267 = vsel %vm237, %v220, 0.0
      %v268 = vadd.f32 %v266, %v267
      %v269 = vsel %vm237, %v221, 0.0
      %v270 = vadd.f32 %v268, %v269
      %v271 = vsel %vm237, %v222, 0.0
      %v272 = vadd.f32 %v270, %v271
      %v273 = vsel %vm237, %v223, 0.0
      %v274 = vadd.f32 %v272, %v273
      %v275 = vsel %vm237, %v224, 0.0
      %v276 = vadd.f32 %v274, %v275
      %v277 = vsel %vm237, %v225, 0.0
      %v278 = vadd.f32 %v276, %v277
      %v279 = vsel %vm237, %v226, 0.0
      %v280 = vadd.f32 %v278, %v279
      %v281 = vsel %vm237, %v227, 0.0
      %v282 = vadd.f32 %v280, %v281
      %v283 = vsel %vm237, %v228, 0.0
      %v284 = vadd.f32 %v282, %v283
      %v285 = vsel %vm237, %v229, 0.0
      %v286 = vadd.f32 %v284, %v285
      %v287 = vsel %vm237, %v230, 0.0
      %v288 = vadd.f32 %v286, %v287
      %v289 = vsel %vm237, %v231, 0.0
      %v290 = vadd.f32 %v288, %v289
      %v291 = vsel %vm237, %v232, 0.0
      %v292 = vadd.f32 %v290, %v291
      %v293 = vsel %vm237, %v233, 0.0
      %v294 = vadd.f32 %v292, %v293
      %v295 = vsel %vm237, %v234, 0.0
      %v296 = vadd.f32 %v294, %v295
      %v297 = vsel %vm237, %v235, 0.0
      %v298 = vadd.f32 %v296, %v297
      %v299 = vsel %vm237, %v236, 0.0
      %v300 = vadd.f32 %v298, %v299
      %v301 = vrot.slane %v300, 4
      %v302 = vadd.f32 %v300, %v301
      %v303 = vrot.slane %v302, 2
      %v304 = vadd.f32 %v302, %v303
      %v305 = vrot.slane %v304, 1
      %v306 = vadd.f32 %v304, %v305
      %v307 = vadd.f32 %v306, 0.0
      %v308 = vrsqrt.pop %v307
      %v309 = vmul.f32 %v307, %v308
      %vm310 = vcmp.eq.f32.partialorder %v307, inf
      %v311 = vsel %vm310, %v307, %v309
      %vm312 = vcmp.eq.f32.partialorder %v307, 0.0
      %v313 = vand.u32 %v307, 2147483648
      %v314 = vsel %vm312, %v313, %v311
      %v315 = vsel %vm237, %v314, 0.0
      %316 = vadd.xlane.f32.xlu0 %v315
      %v317 = vpop.xlane.xlu0 %316
      %v318 = vrcp.pop 32.0
      %v319 = vmul.f32 %v317, %v318
      %v320 = vadd.f32 %v319, 1e-06
      %v321 = vrcp.pop %v320
      %v322 = vmul.f32 %v314, %v321
      %v323 = vmul.f32 %v171, %v322
      %v324 = vadd.f32 %v323, 1.0
      %v326 = vlaneseq
      %v327 = vshrl.u32 %v326, 7
      %v328 = vsub.s32 0, %v327
      %v329 = vrot.slane %v324, %v328
      %v331 = vmul.f32 %v173, %v329
      %v332 = vmul.f32 %v174, %v329
      %v333 = vmul.f32 %v175, %v329
      %v334 = vmul.f32 %v176, %v329
      %v335 = vmul.f32 %v177, %v329
      %v336 = vmul.f32 %v178, %v329
      %v337 = vmul.f32 %v179, %v329
      %v338 = vmul.f32 %v180, %v329
      %v339 = vmul.f32 %v181, %v329
      %v340 = vmul.f32 %v182, %v329
      %v341 = vmul.f32 %v183, %v329
      %v342 = vmul.f32 %v184, %v329
      %v343 = vmul.f32 %v185, %v329
      %v344 = vmul.f32 %v186, %v329
      %v345 = vmul.f32 %v187, %v329
      %v346 = vmul.f32 %v188, %v329
      %v347 = vmul.f32 %v189, %v329
      %v348 = vmul.f32 %v190, %v329
      %v349 = vmul.f32 %v191, %v329
      %v350 = vmul.f32 %v192, %v329
      %v351 = vmul.f32 %v193, %v329
      %v352 = vmul.f32 %v194, %v329
      %v353 = vmul.f32 %v195, %v329
      %v354 = vmul.f32 %v196, %v329
      %v355 = vmul.f32 %v197, %v329
      %v356 = vmul.f32 %v198, %v329
      %v357 = vmul.f32 %v199, %v329
      %v358 = vmul.f32 %v200, %v329
      %v359 = vmul.f32 %v201, %v329
      %v360 = vmul.f32 %v202, %v329
      %v361 = vmul.f32 %v203, %v329
      %v362 = vmul.f32 %v204, %v329
      %v364 = vlaneseq
      %v365 = vshrl.u32 %v364, 7
      %v366 = vsub.s32 0, %v365
      %v367 = vrot.slane %v172, %v366
      %v369 = vadd.f32 %v331, %v367
      %v370 = vadd.f32 %v332, %v367
      %v371 = vadd.f32 %v333, %v367
      %v372 = vadd.f32 %v334, %v367
      %v373 = vadd.f32 %v335, %v367
      %v374 = vadd.f32 %v336, %v367
      %v375 = vadd.f32 %v337, %v367
      %v376 = vadd.f32 %v338, %v367
      %v377 = vadd.f32 %v339, %v367
      %v378 = vadd.f32 %v340, %v367
      %v379 = vadd.f32 %v341, %v367
      %v380 = vadd.f32 %v342, %v367
      %v381 = vadd.f32 %v343, %v367
      %v382 = vadd.f32 %v344, %v367
      %v383 = vadd.f32 %v345, %v367
      %v384 = vadd.f32 %v346, %v367
      %v385 = vadd.f32 %v347, %v367
      %v386 = vadd.f32 %v348, %v367
      %v387 = vadd.f32 %v349, %v367
      %v388 = vadd.f32 %v350, %v367
      %v389 = vadd.f32 %v351, %v367
      %v390 = vadd.f32 %v352, %v367
      %v391 = vadd.f32 %v353, %v367
      %v392 = vadd.f32 %v354, %v367
      %v393 = vadd.f32 %v355, %v367
      %v394 = vadd.f32 %v356, %v367
      %v395 = vadd.f32 %v357, %v367
      %v396 = vadd.f32 %v358, %v367
      %v397 = vadd.f32 %v359, %v367
      %v398 = vadd.f32 %v360, %v367
      %v399 = vadd.f32 %v361, %v367
      %v400 = vadd.f32 %v362, %v367
      %401 = vst.msk [vmem:[%s170] sm:$0xff] %vm237, %v369
      %402 = vst.msk [vmem:[%s170 + $0x8] sm:$0xff] %vm237, %v370
      %403 = vst.msk [vmem:[%s170 + $0x10] sm:$0xff] %vm237, %v371
      %404 = vst.msk [vmem:[%s170 + $0x18] sm:$0xff] %vm237, %v372
      %405 = vst.msk [vmem:[%s170 + $0x20] sm:$0xff] %vm237, %v373
      %406 = vst.msk [vmem:[%s170 + $0x28] sm:$0xff] %vm237, %v374
      %407 = vst.msk [vmem:[%s170 + $0x30] sm:$0xff] %vm237, %v375
      %408 = vst.msk [vmem:[%s170 + $0x38] sm:$0xff] %vm237, %v376
      %409 = vst.msk [vmem:[%s170 + $0x40] sm:$0xff] %vm237, %v377
      %410 = vst.msk [vmem:[%s170 + $0x48] sm:$0xff] %vm237, %v378
      %411 = vst.msk [vmem:[%s170 + $0x50] sm:$0xff] %vm237, %v379
      %412 = vst.msk [vmem:[%s170 + $0x58] sm:$0xff] %vm237, %v380
      %413 = vst.msk [vmem:[%s170 + $0x60] sm:$0xff] %vm237, %v381
      %414 = vst.msk [vmem:[%s170 + $0x68] sm:$0xff] %vm237, %v382
      %415 = vst.msk [vmem:[%s170 + $0x70] sm:$0xff] %vm237, %v383
      %416 = vst.msk [vmem:[%s170 + $0x78] sm:$0xff] %vm237, %v384
      %417 = vst.msk [vmem:[%s170 + $0x80] sm:$0xff] %vm237, %v385
      %418 = vst.msk [vmem:[%s170 + $0x88] sm:$0xff] %vm237, %v386
      %419 = vst.msk [vmem:[%s170 + $0x90] sm:$0xff] %vm237, %v387
      %420 = vst.msk [vmem:[%s170 + $0x98] sm:$0xff] %vm237, %v388
      %421 = vst.msk [vmem:[%s170 + $0xa0] sm:$0xff] %vm237, %v389
      %422 = vst.msk [vmem:[%s170 + $0xa8] sm:$0xff] %vm237, %v390
      %423 = vst.msk [vmem:[%s170 + $0xb0] sm:$0xff] %vm237, %v391
      %424 = vst.msk [vmem:[%s170 + $0xb8] sm:$0xff] %vm237, %v392
      %425 = vst.msk [vmem:[%s170 + $0xc0] sm:$0xff] %vm237, %v393
      %426 = vst.msk [vmem:[%s170 + $0xc8] sm:$0xff] %vm237, %v394
      %427 = vst.msk [vmem:[%s170 + $0xd0] sm:$0xff] %vm237, %v395
      %428 = vst.msk [vmem:[%s170 + $0xd8] sm:$0xff] %vm237, %v396
      %429 = vst.msk [vmem:[%s170 + $0xe0] sm:$0xff] %vm237, %v397
      %430 = vst.msk [vmem:[%s170 + $0xe8] sm:$0xff] %vm237, %v398
      %431 = vst.msk [vmem:[%s170 + $0xf0] sm:$0xff] %vm237, %v399
      %432 = vst.msk [vmem:[%s170 + $0xf8] sm:$0xff] %vm237, %v400
      %p433 = scmp.lt.s32.totalorder %s14, 1
      %s434 = scalar_select %p433, %s14, 1
      %s435 = smul.addr %s434, 32
      %s436 = smul.addr %s435, 8
      %s437 = scalar_lea.vmem %s3, %s436
      // Predicated region
      $region33: #{tpu_custom_call.1} parent=31 // pred_check
        %p438 = pneg %p100
      $region34: #{tpu_custom_call.1} parent=31 // pred_check_branch
        %440 = sbr.rel (%p438) target = $region36
      $region35: #{tpu_custom_call.1} parent=31 // pred_region
        _
      $region36: #{tpu_custom_call.1} parent=31 // pred_fallthru
        _
    $region32: #{tpu_custom_call.1} parent=5 // pred_fallthru
      _
    %p441 = scmp.le.s32.totalorder 2, %s9
    // Predicated region
    $region37: #{tpu_custom_call.1} parent=5 // pred_check
      %p442 = pneg %p441
    $region38: #{tpu_custom_call.1} parent=5 // pred_check_branch
      %444 = sbr.rel (%p442) target = $region40
    $region39: #{tpu_custom_call.1} parent=5 // pred_region
      %s445 = ssub.s32 %s9, 2
      // Predicated region
      $region41: #{tpu_custom_call.1} parent=39 // pred_check
        %p446 = pneg %p106
      $region42: #{tpu_custom_call.1} parent=39 // pred_check_branch
        %448 = sbr.rel (%p446) target = $region44
      $region43: #{tpu_custom_call.1} parent=39 // pred_region
        %p449 = scmp.lt.s32.totalorder %s15, 1
        %s450 = scalar_select %p449, %s15, 1
        %s451 = smul.addr %s450, 32
        %s452 = smul.addr %s451, 8
        %s453 = scalar_lea.vmem %s3, %s452
      $region44: #{tpu_custom_call.1} parent=39 // pred_fallthru
        _
    $region40: #{tpu_custom_call.1} parent=5 // pred_fallthru
      _
  $region6: #{tpu_custom_call.1} parent=0 // loop_footer
    %s13 = sadd.s32 1, %s9
  $region7: #{tpu_custom_call.1} parent=0 // loop_footer_branch
    %8 = sbr.rel target = $region3
  $region8: #{tpu_custom_call.1} parent=0 // loop_exit
    _

</llo_original>
